<compile_context>
chip_gen: v7x
topology: tpu7x:2x2x1
jax: 0.10.0
libtpu: 0.0.40
codegen_flags: <defaults>
</compile_context>

<pallas_src>
import jax
import jax.numpy as jnp
from jax.experimental import pallas as pl
from jax.experimental.pallas import tpu as pltpu


def _ideal_filter_kernel(signal_ref, v_ref, vtw_ref, o_ref):
    # signal_ref: (tm, N) bf16, v_ref: (N, Kp) bf16, vtw_ref: (Kp, N) bf16
    # o_ref: (tm, N) in the original signal dtype.
    sig = signal_ref[...]
    proj = jnp.dot(sig, v_ref[...], preferred_element_type=jnp.float32)      # (tm, Kp)
    recon = jnp.dot(proj.astype(vtw_ref.dtype), vtw_ref[...],
                    preferred_element_type=jnp.float32)                      # (tm, N)
    o_ref[...] = recon.astype(o_ref.dtype)


def ideal_filter_forward(signal, ideal_pass, weight, *, tm=256,
                         compute_dtype=jnp.bfloat16):
    """signal: (M, N_items), ideal_pass: (N_items, K). Returns (M, N_items)."""
    M, N = signal.shape
    Nv, K = ideal_pass.shape
    assert N == Nv

    tm = min(tm, M)
    assert M % tm == 0, f"M={M} must be a multiple of tm={tm}"

    # --- static (offline) operand preprocessing ------------------------------
    # Pad the rank dimension K up to a multiple of 128 so the second matmul's
    # contraction does not starve the 128/256-wide MXU. Zero columns are exact.
    Kp = max(128, pl.cdiv(K, 128) * 128)

    v = ideal_pass.astype(compute_dtype)
    # Hoisted transpose with the scalar weight folded in (no per-tile scale,
    # no recompile when weight changes).
    vtw = (ideal_pass.T * jnp.asarray(weight, ideal_pass.dtype)).astype(compute_dtype)
    if Kp != K:
        v = jnp.pad(v, ((0, 0), (0, Kp - K)))
        vtw = jnp.pad(vtw, ((0, Kp - K), (0, 0)))

    sig = signal.astype(compute_dtype)

    # --- explicit VMEM budget (double-buffered tiles + resident operands) ----
    c_bytes = jnp.dtype(compute_dtype).itemsize
    o_bytes = jnp.dtype(signal.dtype).itemsize
    vmem_needed = (
        2 * tm * N * c_bytes            # signal row tiles (double-buffered)
        + 2 * tm * N * o_bytes          # output row tiles (double-buffered)
        + 2 * N * Kp * c_bytes          # V  (constant index map)
        + 2 * Kp * N * c_bytes          # weighted V^T (constant index map)
        + tm * Kp * 4 + tm * N * 4      # f32 intermediates
    )
    vmem_limit = int(min(max(4 * vmem_needed, 16 * 2**20), 48 * 2**20))

    return pl.pallas_call(
        _ideal_filter_kernel,
        out_shape=jax.ShapeDtypeStruct((M, N), signal.dtype),
        grid_spec=pltpu.PrefetchScalarGridSpec(
            num_scalar_prefetch=0,
            grid=(M // tm,),
            in_specs=[
                pl.BlockSpec((tm, N), lambda i: (i, 0)),   # row tile of signal
                pl.BlockSpec((N, Kp), lambda i: (0, 0)),   # resident V (padded)
                pl.BlockSpec((Kp, N), lambda i: (0, 0)),   # resident weight * V^T
            ],
            out_specs=pl.BlockSpec((tm, N), lambda i: (i, 0)),
        ),
        compiler_params=pltpu.CompilerParams(
            dimension_semantics=("parallel",),
            vmem_limit_bytes=vmem_limit,
        ),
    )(sig, v, vtw)


if __name__ == "__main__":
    # Small deterministic example: 512 users, 256 items, threshold (k) = 32.
    # M=512 with tm=256 gives a 2-step parallel grid (both TCs busy on v7x).
    M, N_ITEMS, K = 512, 256, 32
    WEIGHT = 0.3

    key = jax.random.PRNGKey(0)
    k_sig, k_v = jax.random.split(key)
    signal = jax.random.normal(k_sig, (M, N_ITEMS), dtype=jnp.float32)
    ideal_pass = jax.random.normal(k_v, (N_ITEMS, K), dtype=jnp.float32) / jnp.sqrt(N_ITEMS)

    out = ideal_filter_forward(signal, ideal_pass, WEIGHT)
    out = jax.block_until_ready(out)

    # Reference check (plain JAX, f32). bf16 inputs inside the kernel change
    # low-order bits, so use a tolerance consistent with bf16 precision.
    ref = (signal @ ideal_pass @ ideal_pass.T) * WEIGHT
    assert out.shape == (M, N_ITEMS)
    assert jnp.allclose(out, ref, atol=2e-2, rtol=2e-2), float(jnp.max(jnp.abs(out - ref)))

    print("KERNEL_OK")
</pallas_src>

<mosaic_0001>
module attributes {stable_mosaic.version = 11 : i64} {
  func.func @_ideal_filter_kernel(%arg0: i32, %arg1: memref<256x256xbf16, #tpu.memory_space<vmem>>, %arg2: memref<256x128xbf16, #tpu.memory_space<vmem>>, %arg3: memref<128x256xbf16, #tpu.memory_space<vmem>>, %arg4: memref<256x256xf32, #tpu.memory_space<vmem>>) attributes {dimension_semantics = [#tpu.dimension_semantics<parallel>], iteration_bounds = array<i64: 2>, scalar_prefetch = 0 : i64, scratch_operands = 0 : i64, tpu.core_type = #tpu.core_type<tc>, window_params = [{transform_indices = @transform_0, window_bounds = array<i64: 256, 256>}, {pipeline_mode = #tpu.pipeline_mode<synchronous>, transform_indices = @transform_1, window_bounds = array<i64: 256, 128>}, {pipeline_mode = #tpu.pipeline_mode<synchronous>, transform_indices = @transform_2, window_bounds = array<i64: 128, 256>}, {transform_indices = @transform_3, window_bounds = array<i64: 256, 256>}]} {
    %c0 = arith.constant 0 : index
    %c0_0 = arith.constant 0 : index
    %0 = vector.load %arg1[%c0, %c0_0] : memref<256x256xbf16, #tpu.memory_space<vmem>>, vector<256x256xbf16>
    %c0_1 = arith.constant 0 : index
    %c0_2 = arith.constant 0 : index
    %1 = vector.load %arg2[%c0_1, %c0_2] : memref<256x128xbf16, #tpu.memory_space<vmem>>, vector<256x128xbf16>
    %cst = arith.constant dense<0.000000e+00> : vector<256x128xf32>
    %2 = tpu.matmul %0, %1, %cst {dimension_numbers = #tpu.dot_dimension_numbers<[1], [0], [0], [1], [0, 0, 1, 1], [], []>} : vector<256x256xbf16>, vector<256x128xbf16>, vector<256x128xf32> -> vector<256x128xf32>
    %3 = arith.truncf %2 : vector<256x128xf32> to vector<256x128xbf16>
    %c0_3 = arith.constant 0 : index
    %c0_4 = arith.constant 0 : index
    %4 = vector.load %arg3[%c0_3, %c0_4] : memref<128x256xbf16, #tpu.memory_space<vmem>>, vector<128x256xbf16>
    %cst_5 = arith.constant dense<0.000000e+00> : vector<256x256xf32>
    %5 = tpu.matmul %3, %4, %cst_5 {dimension_numbers = #tpu.dot_dimension_numbers<[1], [0], [0], [1], [0, 0, 1, 1], [], []>} : vector<256x128xbf16>, vector<128x256xbf16>, vector<256x256xf32> -> vector<256x256xf32>
    %c0_6 = arith.constant 0 : index
    %c0_7 = arith.constant 0 : index
    %6 = vector.load %arg4[%c0_6, %c0_7] : memref<256x256xf32, #tpu.memory_space<vmem>>, vector<256x256xf32>
    tpu.vector_store %arg4[%c0_6, %c0_7], %5 {strides = array<i32>} : memref<256x256xf32, #tpu.memory_space<vmem>>, vector<256x256xf32>,
    return
  }
  func.func @transform_0(%arg0: i32) -> (i32, i32) {
    %c0_i32 = arith.constant 0 : i32
    %c0_i32_0 = arith.constant 0 : i32
    return %arg0, %c0_i32 : i32, i32
  }
  func.func @transform_1(%arg0: i32) -> (i32, i32) {
    %c0_i32 = arith.constant 0 : i32
    %c0_i32_0 = arith.constant 0 : i32
    %c0_i32_1 = arith.constant 0 : i32
    return %c0_i32, %c0_i32_0 : i32, i32
  }
  func.func @transform_2(%arg0: i32) -> (i32, i32) {
    %c0_i32 = arith.constant 0 : i32
    %c0_i32_0 = arith.constant 0 : i32
    %c0_i32_1 = arith.constant 0 : i32
    return %c0_i32, %c0_i32_0 : i32, i32
  }
  func.func @transform_3(%arg0: i32) -> (i32, i32) {
    %c0_i32 = arith.constant 0 : i32
    %c0_i32_0 = arith.constant 0 : i32
    return %arg0, %c0_i32 : i32, i32
  }
}

</mosaic_0001>

<llo_original>
// kernel: tpu_custom_call.1
$region0: #{tpu_custom_call.1}
  #allocation0 [shape = 'u32[]', space=smem, size = 0x4, offset = 0x4, fixed_abs, tag = 'smem constant byte address 0x4 - core index']
  #allocation1 [shape = 'u32[144,128]{1,0:T(1,128)}', space=vmem, size = 0x12000, scoped, tag = 'internal scratch']
  %s0 = inlined_call_operand.hbm [shape: bf16[512,256], index: 0, kind: input, shape index: {}]
  %s1 = inlined_call_operand.hbm [shape: bf16[256,128], index: 1, kind: input, shape index: {}]
  %s2 = inlined_call_operand.hbm [shape: bf16[128,256], index: 2, kind: input, shape index: {}]
  %s3 = inlined_call_operand.hbm [shape: f32[512,256], index: 3, kind: output, shape index: {}]
  %s4 = sld [smem:[#allocation0]]
  $region57: #{tpu_custom_call.1} parent=0
    _
  %s6 = ssub.s32 1, %s4
  %s7 = scalar_select 0, %s6, %s4
  $region1: #{tpu_custom_call.1} parent=0
    #allocation2 [shape = 'u8[262144]{0}', space=vmem, size = 0x40000, scoped, tag = 'input window, operand 0']
    #allocation3 [shape = 's32[2]{0}', space=sflag, size = 0x8, scoped, tag = 'scoped memory for tpu_custom_call.1']
    #allocation4 [shape = 's32[2]{0}', space=sflag, size = 0x8, scoped, tag = 'scoped memory for tpu_custom_call.1']
    #allocation5 [shape = 'u8[65536]{0}', space=vmem, size = 0x10000, scoped, tag = 'input window, operand 1, single buffered']
    #allocation6 [shape = 's32[1]{0}', space=sflag, size = 0x4, scoped, tag = 'scoped memory for tpu_custom_call.1']
    #allocation7 [shape = 'u8[65536]{0}', space=vmem, size = 0x10000, scoped, tag = 'input window, operand 2, single buffered']
    #allocation8 [shape = 'u8[524288]{0}', space=vmem, size = 0x80000, scoped, tag = 'output window, operand 0']
    %8 = vsyncpa [#allocation3], 0
    %s9 = scalar_lea.sflag [#allocation3], 1
    %10 = vsyncpa %s9, 0
    %11 = vsyncpa [#allocation6], 0
    %12 = vsyncpa [#allocation4], 0
    %s13 = scalar_lea.sflag [#allocation4], 1
    %14 = vsyncpa %s13, 0
    loop: start=0, step=1, limit=4
    $region2: #{tpu_custom_call.1} parent=1 // loop_pre_header
      _
    $region3: #{tpu_custom_call.1} parent=1 // loop_header
      %s16 = sphi 0, %s20
      %p17 = scmp.ge.s32.totalorder %s16, 4
      %s26 = sphi 0, %s28
      %s29 = sphi 0, %s26
      %s30 = sphi 0, %s29
      %s46 = sphi 0, %s30
      %s50 = sphi 0, %s50
      %s52 = sphi 0, %s50
      %s53 = sphi 0, %s52
      %s67 = sphi 0, %s53
      %s71 = sphi 0, %s71
      %s73 = sphi 0, %s71
      %s74 = sphi 0, %s73
      %s88 = sphi 0, %s74
      %s94 = sphi 0, %s96
      %s97 = sphi 0, %s94
      %s98 = sphi 0, %s97
      %s114 = sphi 0, %s98
    $region4: #{tpu_custom_call.1} parent=1 // loop_header_branch
      %19 = sbr.rel (%p17) target = $region8
    $region5: #{tpu_custom_call.1} parent=1 // loop_body
      %s21 = ssub.s32 %s16, 1
      %s22 = ssub.s32 %s16, 2
      %s23 = sadd.s32 %s16, 1
      %s24 = ssub.s32 %s16, %s23
      %p25 = scmp.eq.s32.totalorder %s24, 0
      %s27 = sadd.s32 %s26, 1
      %s28 = scalar_select %p25, %s26, %s27
      %p31 = pneg %p25
      %p32 = scmp.eq.s32.totalorder %s16, 1
      %p33 = por %p31, %p32
      %p34 = scmp.ne.s32.totalorder %s26, %s29
      %p35 = scmp.eq.s32.totalorder %s16, 0
      %p36 = por %p34, %p35
      %p37 = scmp.ne.s32.totalorder %s26, %s29
      %p38 = scmp.eq.s32.totalorder %s21, 1
      %p39 = por %p37, %p38
      %p40 = scmp.ne.s32.totalorder %s29, %s30
      %p41 = scmp.eq.s32.totalorder %s21, 0
      %p42 = por %p40, %p41
      %p43 = scmp.ne.s32.totalorder %s29, %s30
      %p44 = scmp.eq.s32.totalorder %s22, 1
      %p45 = por %p43, %p44
      %p47 = scmp.ne.s32.totalorder %s30, %s46
      %p48 = scmp.eq.s32.totalorder %s22, 0
      %p49 = por %p47, %p48
      %s51 = sadd.s32 %s50, 1
      %p54 = scmp.eq.s32.totalorder %s16, 1
      %p55 = scmp.ne.s32.totalorder %s50, %s52
      %p56 = scmp.eq.s32.totalorder %s16, 0
      %p57 = por %p55, %p56
      %p58 = scmp.ne.s32.totalorder %s50, %s52
      %p59 = scmp.eq.s32.totalorder %s21, 1
      %p60 = por %p58, %p59
      %p61 = scmp.ne.s32.totalorder %s52, %s53
      %p62 = scmp.eq.s32.totalorder %s21, 0
      %p63 = por %p61, %p62
      %p64 = scmp.ne.s32.totalorder %s52, %s53
      %p65 = scmp.eq.s32.totalorder %s22, 1
      %p66 = por %p64, %p65
      %p68 = scmp.ne.s32.totalorder %s53, %s67
      %p69 = scmp.eq.s32.totalorder %s22, 0
      %p70 = por %p68, %p69
      %s72 = sadd.s32 %s71, 1
      %p75 = scmp.eq.s32.totalorder %s16, 1
      %p76 = scmp.ne.s32.totalorder %s71, %s73
      %p77 = scmp.eq.s32.totalorder %s16, 0
      %p78 = por %p76, %p77
      %p79 = scmp.ne.s32.totalorder %s71, %s73
      %p80 = scmp.eq.s32.totalorder %s21, 1
      %p81 = por %p79, %p80
      %p82 = scmp.ne.s32.totalorder %s73, %s74
      %p83 = scmp.eq.s32.totalorder %s21, 0
      %p84 = por %p82, %p83
      %p85 = scmp.ne.s32.totalorder %s73, %s74
      %p86 = scmp.eq.s32.totalorder %s22, 1
      %p87 = por %p85, %p86
      %p89 = scmp.ne.s32.totalorder %s74, %s88
      %p90 = scmp.eq.s32.totalorder %s22, 0
      %p91 = por %p89, %p90
      %s92 = ssub.s32 %s16, %s23
      %p93 = scmp.eq.s32.totalorder %s92, 0
      %s95 = sadd.s32 %s94, 1
      %s96 = scalar_select %p93, %s94, %s95
      %p99 = pneg %p93
      %p100 = scmp.eq.s32.totalorder %s16, 1
      %p101 = por %p99, %p100
      %p102 = scmp.ne.s32.totalorder %s94, %s97
      %p103 = scmp.eq.s32.totalorder %s16, 0
      %p104 = por %p102, %p103
      %p105 = scmp.ne.s32.totalorder %s94, %s97
      %p106 = scmp.eq.s32.totalorder %s21, 1
      %p107 = por %p105, %p106
      %p108 = scmp.ne.s32.totalorder %s97, %s98
      %p109 = scmp.eq.s32.totalorder %s21, 0
      %p110 = por %p108, %p109
      %p111 = scmp.ne.s32.totalorder %s97, %s98
      %p112 = scmp.eq.s32.totalorder %s22, 1
      %p113 = por %p111, %p112
      %p115 = scmp.ne.s32.totalorder %s98, %s114
      %p116 = scmp.eq.s32.totalorder %s22, 0
      %p117 = por %p115, %p116
      %p118 = scmp.le.s32.totalorder 1, %s16
      %p119 = scmp.lt.s32.totalorder %s16, 3
      %p120 = pnand %p118, %p119
      %p121 = pneg %p120
      // Predicated region
      $region9: #{tpu_custom_call.1} parent=5 // pred_check
        _
      $region10: #{tpu_custom_call.1} parent=5 // pred_check_branch
        %123 = sbr.rel (%p120) target = $region12
      $region11: #{tpu_custom_call.1} parent=5 // pred_region
        %s124 = ssub.s32 %s16, 1
        // Predicated region
        $region13: #{tpu_custom_call.1} parent=11 // pred_check
          %p125 = pneg %p63
        $region14: #{tpu_custom_call.1} parent=11 // pred_check_branch
          %127 = sbr.rel (%p125) target = $region16
        $region15: #{tpu_custom_call.1} parent=11 // pred_region
          %s129 = ssub.s32 2048, 2048
          %130 = vsyncadd [#allocation6], %s129
          %s131 = sshll.u32 [#allocation5], 4
          %s132 = int_to_ptr.vmem [resolvable:$true] %s131
          %137 = dma.hbm_to_vmem [thread:$0]  %s1, 2048, %s132, [#allocation6], 64, 64, 4
        $region16: #{tpu_custom_call.1} parent=11 // pred_fallthru
          _
        // Predicated region
        $region17: #{tpu_custom_call.1} parent=11 // pred_check
          %p138 = pneg %p84
        $region18: #{tpu_custom_call.1} parent=11 // pred_check_branch
          %140 = sbr.rel (%p138) target = $region20
        $region19: #{tpu_custom_call.1} parent=11 // pred_region
          %s142 = ssub.s32 2048, 2048
          %143 = vsyncadd [#allocation6], %s142
          %s144 = sshll.u32 [#allocation7], 4
          %s145 = int_to_ptr.vmem [resolvable:$true] %s144
          %150 = dma.hbm_to_vmem [thread:$0]  %s2, 2048, %s145, [#allocation6], 128, 128, 8
        $region20: #{tpu_custom_call.1} parent=11 // pred_fallthru
          _
      $region12: #{tpu_custom_call.1} parent=5 // pred_fallthru
        _
      %p151 = scmp.lt.s32.totalorder %s16, 2
      // Predicated region
      $region21: #{tpu_custom_call.1} parent=5 // pred_check
        %p152 = pneg %p151
      $region22: #{tpu_custom_call.1} parent=5 // pred_check_branch
        %154 = sbr.rel (%p152) target = $region24
      $region23: #{tpu_custom_call.1} parent=5 // pred_region
        // Predicated region
        $region25: #{tpu_custom_call.1} parent=23 // pred_check
          %p155 = pneg %p36
        $region26: #{tpu_custom_call.1} parent=23 // pred_check_branch
          %157 = sbr.rel (%p155) target = $region28
        $region27: #{tpu_custom_call.1} parent=23 // pred_region
          %s158 = sand.u32 %s26, 1
          %s159 = scalar_lea.sflag [#allocation3], %s158
          %s160 = sand.u32 %s26, 1
          %s161 = smul.addr %s160, 256
          %s162 = scalar_lea.vmem [#allocation2], %s161
          %s163 = smul.u32 32, %s16
          %s165 = ssub.s32 4096, 4096
          %166 = vsyncadd %s159, %s165
          %s167 = smul.addr %s163, 2
          %s168 = smul.addr %s167, 64
          %s169 = scalar_lea.hbm %s0, %s168
          %s170 = sshll.u32 %s162, 4
          %s171 = int_to_ptr.vmem [resolvable:$true] %s170
          %176 = dma.hbm_to_vmem [thread:$0]  %s169, 4096, %s171, %s159, 128, 128, 8
        $region28: #{tpu_custom_call.1} parent=23 // pred_fallthru
          _
      $region24: #{tpu_custom_call.1} parent=5 // pred_fallthru
        _
      %p177 = scmp.le.s32.totalorder 1, %s16
      %p178 = scmp.lt.s32.totalorder %s16, 3
      %p179 = pnand %p177, %p178
      %p180 = pneg %p179
      // Predicated region
      $region29: #{tpu_custom_call.1} parent=5 // pred_check
        _
      $region30: #{tpu_custom_call.1} parent=5 // pred_check_branch
        %182 = sbr.rel (%p179) target = $region32
      $region31: #{tpu_custom_call.1} parent=5 // pred_region
        %s183 = ssub.s32 %s16, 1
        %s184 = sand.u32 %s29, 1
        %s185 = scalar_lea.sflag [#allocation3], %s184
        %s186 = sand.u32 %s29, 1
        %s187 = smul.addr %s186, 256
        %s188 = scalar_lea.vmem [#allocation2], %s187
        // Predicated region
        $region33: #{tpu_custom_call.1} parent=31 // pred_check
          %p189 = pneg %p42
        $region34: #{tpu_custom_call.1} parent=31 // pred_check_branch
          %191 = sbr.rel (%p189) target = $region36
        $region35: #{tpu_custom_call.1} parent=31 // pred_region
          %192 = dma.done %s185, 4096
        $region36: #{tpu_custom_call.1} parent=31 // pred_fallthru
          _
        // Predicated region
        $region37: #{tpu_custom_call.1} parent=31 // pred_check
          %p193 = pneg %p63
        $region38: #{tpu_custom_call.1} parent=31 // pred_check_branch
          %195 = sbr.rel (%p193) target = $region40
        $region39: #{tpu_custom_call.1} parent=31 // pred_region
          %196 = dma.done [#allocation6], 2048
        $region40: #{tpu_custom_call.1} parent=31 // pred_fallthru
          _
        // Predicated region
        $region41: #{tpu_custom_call.1} parent=31 // pred_check
          %p197 = pneg %p84
        $region42: #{tpu_custom_call.1} parent=31 // pred_check_branch
          %199 = sbr.rel (%p197) target = $region44
        $region43: #{tpu_custom_call.1} parent=31 // pred_region
          %200 = dma.done [#allocation6], 2048
        $region44: #{tpu_custom_call.1} parent=31 // pred_fallthru
          _
        %s201 = sand.u32 %s29, 1
        %s202 = scalar_lea.sflag [#allocation3], %s201
        %s203 = sand.u32 %s29, 1
        %s204 = smul.addr %s203, 256
        %s205 = scalar_lea.vmem [#allocation2], %s204
        %p206 = pneg %p42
        %p207 = pneg %p39
        %p208 = pneg %p63
        %p209 = pneg %p60
        %p210 = pneg %p84
        %p211 = pneg %p81
        %p212 = pneg %p110
        %p213 = pneg %p107
        %s214 = sand.u32 %s97, 1
        %s215 = scalar_lea.sflag [#allocation4], %s214
        %s216 = sand.u32 %s97, 1
        %s217 = smul.addr %s216, 512
        %s218 = scalar_lea.vmem [#allocation8], %s217
        %s219 = smul.u32 32, %s21
        %s220 = smul.u32 32, %s21
        %v222 = vld [vmem:[%s188] sm:$0xff]
        %v223 = vld [vmem:[%s188 + $0x8] sm:$0xff]
        %v224 = vld [vmem:[%s188 + $0x10] sm:$0xff]
        %v225 = vld [vmem:[%s188 + $0x18] sm:$0xff]
        %v226 = vld [vmem:[%s188 + $0x20] sm:$0xff]
        %v227 = vld [vmem:[%s188 + $0x28] sm:$0xff]
        %v228 = vld [vmem:[%s188 + $0x30] sm:$0xff]
        %v229 = vld [vmem:[%s188 + $0x38] sm:$0xff]
        %v230 = vld [vmem:[%s188 + $0x40] sm:$0xff]
        %v231 = vld [vmem:[%s188 + $0x48] sm:$0xff]
        %v232 = vld [vmem:[%s188 + $0x50] sm:$0xff]
        %v233 = vld [vmem:[%s188 + $0x58] sm:$0xff]
        %v234 = vld [vmem:[%s188 + $0x60] sm:$0xff]
        %v235 = vld [vmem:[%s188 + $0x68] sm:$0xff]
        %v236 = vld [vmem:[%s188 + $0x70] sm:$0xff]
        %v237 = vld [vmem:[%s188 + $0x78] sm:$0xff]
        %v238 = vld [vmem:[%s188 + $0x80] sm:$0xff]
        %v239 = vld [vmem:[%s188 + $0x88] sm:$0xff]
        %v240 = vld [vmem:[%s188 + $0x90] sm:$0xff]
        %v241 = vld [vmem:[%s188 + $0x98] sm:$0xff]
        %v242 = vld [vmem:[%s188 + $0xa0] sm:$0xff]
        %v243 = vld [vmem:[%s188 + $0xa8] sm:$0xff]
        %v244 = vld [vmem:[%s188 + $0xb0] sm:$0xff]
        %v245 = vld [vmem:[%s188 + $0xb8] sm:$0xff]
        %v246 = vld [vmem:[%s188 + $0xc0] sm:$0xff]
        %v247 = vld [vmem:[%s188 + $0xc8] sm:$0xff]
        %v248 = vld [vmem:[%s188 + $0xd0] sm:$0xff]
        %v249 = vld [vmem:[%s188 + $0xd8] sm:$0xff]
        %v250 = vld [vmem:[%s188 + $0xe0] sm:$0xff]
        %v251 = vld [vmem:[%s188 + $0xe8] sm:$0xff]
        %v252 = vld [vmem:[%s188 + $0xf0] sm:$0xff]
        %v253 = vld [vmem:[%s188 + $0xf8] sm:$0xff]
        %v254 = vld [vmem:[#allocation5] sm:$0xf]
        %v255 = vld [vmem:[#allocation5 + $0x4] sm:$0xf]
        %v256 = vld [vmem:[#allocation5 + $0x8] sm:$0xf]
        %v257 = vld [vmem:[#allocation5 + $0xc] sm:$0xf]
        %v258 = vld [vmem:[#allocation5 + $0x10] sm:$0xf]
        %v259 = vld [vmem:[#allocation5 + $0x14] sm:$0xf]
        %v260 = vld [vmem:[#allocation5 + $0x18] sm:$0xf]
        %v261 = vld [vmem:[#allocation5 + $0x1c] sm:$0xf]
        %v262 = vld [vmem:[#allocation5 + $0x20] sm:$0xf]
        %v263 = vld [vmem:[#allocation5 + $0x24] sm:$0xf]
        %v264 = vld [vmem:[#allocation5 + $0x28] sm:$0xf]
        %v265 = vld [vmem:[#allocation5 + $0x2c] sm:$0xf]
        %v266 = vld [vmem:[#allocation5 + $0x30] sm:$0xf]
        %v267 = vld [vmem:[#allocation5 + $0x34] sm:$0xf]
        %v268 = vld [vmem:[#allocation5 + $0x38] sm:$0xf]
        %v269 = vld [vmem:[#allocation5 + $0x3c] sm:$0xf]
        %v270 = vld [vmem:[#allocation5 + $0x40] sm:$0xf]
        %v271 = vld [vmem:[#allocation5 + $0x44] sm:$0xf]
        %v272 = vld [vmem:[#allocation5 + $0x48] sm:$0xf]
        %v273 = vld [vmem:[#allocation5 + $0x4c] sm:$0xf]
        %v274 = vld [vmem:[#allocation5 + $0x50] sm:$0xf]
        %v275 = vld [vmem:[#allocation5 + $0x54] sm:$0xf]
        %v276 = vld [vmem:[#allocation5 + $0x58] sm:$0xf]
        %v277 = vld [vmem:[#allocation5 + $0x5c] sm:$0xf]
        %v278 = vld [vmem:[#allocation5 + $0x60] sm:$0xf]
        %v279 = vld [vmem:[#allocation5 + $0x64] sm:$0xf]
        %v280 = vld [vmem:[#allocation5 + $0x68] sm:$0xf]
        %v281 = vld [vmem:[#allocation5 + $0x6c] sm:$0xf]
        %v282 = vld [vmem:[#allocation5 + $0x70] sm:$0xf]
        %v283 = vld [vmem:[#allocation5 + $0x74] sm:$0xf]
        %v284 = vld [vmem:[#allocation5 + $0x78] sm:$0xf]
        %v285 = vld [vmem:[#allocation5 + $0x7c] sm:$0xf]
        %v318 = vunpack.c.l.b16 %v222
        %v319 = vunpack.c.h.b16 %v222
        %v320 = vunpack.c.l.b16 %v223
        %v321 = vunpack.c.h.b16 %v223
        %v322 = vunpack.c.l.b16 %v224
        %v323 = vunpack.c.h.b16 %v224
        %v324 = vunpack.c.l.b16 %v225
        %v325 = vunpack.c.h.b16 %v225
        %v326 = vunpack.c.l.b16 %v226
        %v327 = vunpack.c.h.b16 %v226
        %v328 = vunpack.c.l.b16 %v227
        %v329 = vunpack.c.h.b16 %v227
        %v330 = vunpack.c.l.b16 %v228
        %v331 = vunpack.c.h.b16 %v228
        %v332 = vunpack.c.l.b16 %v229
        %v333 = vunpack.c.h.b16 %v229
        %v334 = vunpack.c.l.b16 %v230
        %v335 = vunpack.c.h.b16 %v230
        %v336 = vunpack.c.l.b16 %v231
        %v337 = vunpack.c.h.b16 %v231
        %v338 = vunpack.c.l.b16 %v232
        %v339 = vunpack.c.h.b16 %v232
        %v340 = vunpack.c.l.b16 %v233
        %v341 = vunpack.c.h.b16 %v233
        %v342 = vunpack.c.l.b16 %v234
        %v343 = vunpack.c.h.b16 %v234
        %v344 = vunpack.c.l.b16 %v235
        %v345 = vunpack.c.h.b16 %v235
        %v346 = vunpack.c.l.b16 %v236
        %v347 = vunpack.c.h.b16 %v236
        %v348 = vunpack.c.l.b16 %v237
        %v349 = vunpack.c.h.b16 %v237
        %v350 = vunpack.c.l.b16 %v238
        %v351 = vunpack.c.h.b16 %v238
        %v352 = vunpack.c.l.b16 %v239
        %v353 = vunpack.c.h.b16 %v239
        %v354 = vunpack.c.l.b16 %v240
        %v355 = vunpack.c.h.b16 %v240
        %v356 = vunpack.c.l.b16 %v241
        %v357 = vunpack.c.h.b16 %v241
        %v358 = vunpack.c.l.b16 %v242
        %v359 = vunpack.c.h.b16 %v242
        %v360 = vunpack.c.l.b16 %v243
        %v361 = vunpack.c.h.b16 %v243
        %v362 = vunpack.c.l.b16 %v244
        %v363 = vunpack.c.h.b16 %v244
        %v364 = vunpack.c.l.b16 %v245
        %v365 = vunpack.c.h.b16 %v245
        %v366 = vunpack.c.l.b16 %v246
        %v367 = vunpack.c.h.b16 %v246
        %v368 = vunpack.c.l.b16 %v247
        %v369 = vunpack.c.h.b16 %v247
        %v370 = vunpack.c.l.b16 %v248
        %v371 = vunpack.c.h.b16 %v248
        %v372 = vunpack.c.l.b16 %v249
        %v373 = vunpack.c.h.b16 %v249
        %v374 = vunpack.c.l.b16 %v250
        %v375 = vunpack.c.h.b16 %v250
        %v376 = vunpack.c.l.b16 %v251
        %v377 = vunpack.c.h.b16 %v251
        %v378 = vunpack.c.l.b16 %v252
        %v379 = vunpack.c.h.b16 %v252
        %v380 = vunpack.c.l.b16 %v253
        %v381 = vunpack.c.h.b16 %v253
        %v382 = vpack.c.b16 %v320, %v318
        %v383 = vpack.c.b16 %v321, %v319
        %v384 = vpack.c.b16 %v324, %v322
        %v385 = vpack.c.b16 %v325, %v323
        %v386 = vpack.c.b16 %v328, %v326
        %v387 = vpack.c.b16 %v329, %v327
        %v388 = vpack.c.b16 %v332, %v330
        %v389 = vpack.c.b16 %v333, %v331
        %v390 = vpack.c.b16 %v336, %v334
        %v391 = vpack.c.b16 %v337, %v335
        %v392 = vpack.c.b16 %v340, %v338
        %v393 = vpack.c.b16 %v341, %v339
        %v394 = vpack.c.b16 %v344, %v342
        %v395 = vpack.c.b16 %v345, %v343
        %v396 = vpack.c.b16 %v348, %v346
        %v397 = vpack.c.b16 %v349, %v347
        %v398 = vpack.c.b16 %v352, %v350
        %v399 = vpack.c.b16 %v353, %v351
        %v400 = vpack.c.b16 %v356, %v354
        %v401 = vpack.c.b16 %v357, %v355
        %v402 = vpack.c.b16 %v360, %v358
        %v403 = vpack.c.b16 %v361, %v359
        %v404 = vpack.c.b16 %v364, %v362
        %v405 = vpack.c.b16 %v365, %v363
        %v406 = vpack.c.b16 %v368, %v366
        %v407 = vpack.c.b16 %v369, %v367
        %v408 = vpack.c.b16 %v372, %v370
        %v409 = vpack.c.b16 %v373, %v371
        %v410 = vpack.c.b16 %v376, %v374
        %v411 = vpack.c.b16 %v377, %v375
        %v412 = vpack.c.b16 %v380, %v378
        %v413 = vpack.c.b16 %v381, %v379
        %v478 = vunpack.c.l.b16 %v254
        %v479 = vunpack.c.l.b16 %v255
        %v480 = vunpack.c.l.b16 %v256
        %v481 = vunpack.c.l.b16 %v257
        %v482 = vunpack.c.l.b16 %v258
        %v483 = vunpack.c.l.b16 %v259
        %v484 = vunpack.c.l.b16 %v260
        %v485 = vunpack.c.l.b16 %v261
        %v486 = vunpack.c.l.b16 %v262
        %v487 = vunpack.c.l.b16 %v263
        %v488 = vunpack.c.l.b16 %v264
        %v489 = vunpack.c.l.b16 %v265
        %v490 = vunpack.c.l.b16 %v266
        %v491 = vunpack.c.l.b16 %v267
        %v492 = vunpack.c.l.b16 %v268
        %v493 = vunpack.c.l.b16 %v269
        %v494 = vunpack.c.l.b16 %v270
        %v495 = vunpack.c.l.b16 %v271
        %v496 = vunpack.c.l.b16 %v272
        %v497 = vunpack.c.l.b16 %v273
        %v498 = vunpack.c.l.b16 %v274
        %v499 = vunpack.c.l.b16 %v275
        %v500 = vunpack.c.l.b16 %v276
        %v501 = vunpack.c.l.b16 %v277
        %v502 = vunpack.c.l.b16 %v278
        %v503 = vunpack.c.l.b16 %v279
        %v504 = vunpack.c.l.b16 %v280
        %v505 = vunpack.c.l.b16 %v281
        %v506 = vunpack.c.l.b16 %v282
        %v507 = vunpack.c.l.b16 %v283
        %v508 = vunpack.c.l.b16 %v284
        %v509 = vunpack.c.l.b16 %v285
        %v510 = vpack.c.b16 %v479, %v478
        %v511 = vpack.c.b16 %v481, %v480
        %v512 = vpack.c.b16 %v483, %v482
        %v513 = vpack.c.b16 %v485, %v484
        %v514 = vpack.c.b16 %v487, %v486
        %v515 = vpack.c.b16 %v489, %v488
        %v516 = vpack.c.b16 %v491, %v490
        %v517 = vpack.c.b16 %v493, %v492
        %v518 = vpack.c.b16 %v495, %v494
        %v519 = vpack.c.b16 %v497, %v496
        %v520 = vpack.c.b16 %v499, %v498
        %v521 = vpack.c.b16 %v501, %v500
        %v522 = vpack.c.b16 %v503, %v502
        %v523 = vpack.c.b16 %v505, %v504
        %v524 = vpack.c.b16 %v507, %v506
        %v525 = vpack.c.b16 %v509, %v508
        %542 = vmatprep.subr.bf16.mxu0 0
        %543 = vmatpush1.bf16.msra.mxu0 %v510
        %544 = vmatprep.subr.bf16.mxu0 0
        %545 = vmatpush1.bf16.msra.mxu0 %v511
        %546 = vmatprep.subr.bf16.mxu0 0
        %547 = vmatpush1.bf16.msra.mxu0 %v512
        %548 = vmatprep.subr.bf16.mxu0 0
        %549 = vmatpush1.bf16.msra.mxu0 %v513
        %550 = vmatprep.subr.bf16.mxu0 0
        %551 = vmatpush1.bf16.msra.mxu0 %v514
        %552 = vmatprep.subr.bf16.mxu0 0
        %553 = vmatpush1.bf16.msra.mxu0 %v515
        %554 = vmatprep.subr.bf16.mxu0 0
        %555 = vmatpush1.bf16.msra.mxu0 %v516
        %556 = vmatprep.subr.bf16.mxu0 0
        %557 = vmatpush1.bf16.msra.mxu0 %v517
        %558 = vmatprep.subr.bf16.mxu0 0
        %559 = vmatpush1.bf16.msra.mxu0 %v518
        %560 = vmatprep.subr.bf16.mxu0 0
        %561 = vmatpush1.bf16.msra.mxu0 %v519
        %562 = vmatprep.subr.bf16.mxu0 0
        %563 = vmatpush1.bf16.msra.mxu0 %v520
        %564 = vmatprep.subr.bf16.mxu0 0
        %565 = vmatpush1.bf16.msra.mxu0 %v521
        %566 = vmatprep.subr.bf16.mxu0 0
        %567 = vmatpush1.bf16.msra.mxu0 %v522
        %568 = vmatprep.subr.bf16.mxu0 0
        %569 = vmatpush1.bf16.msra.mxu0 %v523
        %570 = vmatprep.subr.bf16.mxu0 0
        %571 = vmatpush1.bf16.msra.mxu0 %v524
        %572 = vmatprep.subr.bf16.mxu0 0
        %573 = vmatpush1.bf16.msra.mxu0 %v525
        %574 = vmatprep.mubr.bf16.mxu0 %v383
        %575 = vmatmul.mubr.bf16.gmra.mrb[0].mxu0 %v382
        %v576 = vpop.f32.mrb[0].mxu0
        %v577 = vadd.f32 0.0, %v576
        %v578 = vpop.f32.mrb[0].mxu0
        %v579 = vpop.f32.mrb[0].mxu0
        %v580 = vadd.f32 0.0, %v579
        %v581 = vpop.f32.mrb[0].mxu0
        %582 = vmatprep.mubr.bf16.mxu0 %v385
        %583 = vmatmul.mubr.bf16.gmra.mrb[0].mxu0 %v384
        %v584 = vpop.f32.mrb[0].mxu0
        %v585 = vadd.f32 0.0, %v584
        %v586 = vpop.f32.mrb[0].mxu0
        %v587 = vpop.f32.mrb[0].mxu0
        %v588 = vadd.f32 0.0, %v587
        %v589 = vpop.f32.mrb[0].mxu0
        %590 = vmatprep.mubr.bf16.mxu0 %v387
        %591 = vmatmul.mubr.bf16.gmra.mrb[0].mxu0 %v386
        %v592 = vpop.f32.mrb[0].mxu0
        %v593 = vadd.f32 0.0, %v592
        %v594 = vpop.f32.mrb[0].mxu0
        %v595 = vpop.f32.mrb[0].mxu0
        %v596 = vadd.f32 0.0, %v595
        %v597 = vpop.f32.mrb[0].mxu0
        %598 = vmatprep.mubr.bf16.mxu0 %v389
        %599 = vmatmul.mubr.bf16.gmra.mrb[0].mxu0 %v388
        %v600 = vpop.f32.mrb[0].mxu0
        %v601 = vadd.f32 0.0, %v600
        %v602 = vpop.f32.mrb[0].mxu0
        %v603 = vpop.f32.mrb[0].mxu0
        %v604 = vadd.f32 0.0, %v603
        %v605 = vpop.f32.mrb[0].mxu0
        %606 = vmatprep.mubr.bf16.mxu0 %v391
        %607 = vmatmul.mubr.bf16.gmra.mrb[0].mxu0 %v390
        %v608 = vpop.f32.mrb[0].mxu0
        %v609 = vadd.f32 0.0, %v608
        %v610 = vpop.f32.mrb[0].mxu0
        %v611 = vpop.f32.mrb[0].mxu0
        %v612 = vadd.f32 0.0, %v611
        %v613 = vpop.f32.mrb[0].mxu0
        %614 = vmatprep.mubr.bf16.mxu0 %v393
        %615 = vmatmul.mubr.bf16.gmra.mrb[0].mxu0 %v392
        %v616 = vpop.f32.mrb[0].mxu0
        %v617 = vadd.f32 0.0, %v616
        %v618 = vpop.f32.mrb[0].mxu0
        %v619 = vpop.f32.mrb[0].mxu0
        %v620 = vadd.f32 0.0, %v619
        %v621 = vpop.f32.mrb[0].mxu0
        %622 = vmatprep.mubr.bf16.mxu0 %v395
        %623 = vmatmul.mubr.bf16.gmra.mrb[0].mxu0 %v394
        %v624 = vpop.f32.mrb[0].mxu0
        %v625 = vadd.f32 0.0, %v624
        %v626 = vpop.f32.mrb[0].mxu0
        %v627 = vpop.f32.mrb[0].mxu0
        %v628 = vadd.f32 0.0, %v627
        %v629 = vpop.f32.mrb[0].mxu0
        %630 = vmatprep.mubr.bf16.mxu0 %v397
        %631 = vmatmul.mubr.bf16.gmra.mrb[0].mxu0 %v396
        %v632 = vpop.f32.mrb[0].mxu0
        %v633 = vadd.f32 0.0, %v632
        %v634 = vpop.f32.mrb[0].mxu0
        %v635 = vpop.f32.mrb[0].mxu0
        %v636 = vadd.f32 0.0, %v635
        %v637 = vpop.f32.mrb[0].mxu0
        %638 = vmatprep.mubr.bf16.mxu0 %v399
        %639 = vmatmul.mubr.bf16.gmra.mrb[0].mxu0 %v398
        %v640 = vpop.f32.mrb[0].mxu0
        %v641 = vadd.f32 0.0, %v640
        %v642 = vpop.f32.mrb[0].mxu0
        %v643 = vpop.f32.mrb[0].mxu0
        %v644 = vadd.f32 0.0, %v643
        %v645 = vpop.f32.mrb[0].mxu0
        %646 = vmatprep.mubr.bf16.mxu0 %v401
        %647 = vmatmul.mubr.bf16.gmra.mrb[0].mxu0 %v400
        %v648 = vpop.f32.mrb[0].mxu0
        %v649 = vadd.f32 0.0, %v648
        %v650 = vpop.f32.mrb[0].mxu0
        %v651 = vpop.f32.mrb[0].mxu0
        %v652 = vadd.f32 0.0, %v651
        %v653 = vpop.f32.mrb[0].mxu0
        %654 = vmatprep.mubr.bf16.mxu0 %v403
        %655 = vmatmul.mubr.bf16.gmra.mrb[0].mxu0 %v402
        %v656 = vpop.f32.mrb[0].mxu0
        %v657 = vadd.f32 0.0, %v656
        %v658 = vpop.f32.mrb[0].mxu0
        %v659 = vpop.f32.mrb[0].mxu0
        %v660 = vadd.f32 0.0, %v659
        %v661 = vpop.f32.mrb[0].mxu0
        %662 = vmatprep.mubr.bf16.mxu0 %v405
        %663 = vmatmul.mubr.bf16.gmra.mrb[0].mxu0 %v404
        %v664 = vpop.f32.mrb[0].mxu0
        %v665 = vadd.f32 0.0, %v664
        %v666 = vpop.f32.mrb[0].mxu0
        %v667 = vpop.f32.mrb[0].mxu0
        %v668 = vadd.f32 0.0, %v667
        %v669 = vpop.f32.mrb[0].mxu0
        %670 = vmatprep.mubr.bf16.mxu0 %v407
        %671 = vmatmul.mubr.bf16.gmra.mrb[0].mxu0 %v406
        %v672 = vpop.f32.mrb[0].mxu0
        %v673 = vadd.f32 0.0, %v672
        %v674 = vpop.f32.mrb[0].mxu0
        %v675 = vpop.f32.mrb[0].mxu0
        %v676 = vadd.f32 0.0, %v675
        %v677 = vpop.f32.mrb[0].mxu0
        %678 = vmatprep.mubr.bf16.mxu0 %v409
        %679 = vmatmul.mubr.bf16.gmra.mrb[0].mxu0 %v408
        %v680 = vpop.f32.mrb[0].mxu0
        %v681 = vadd.f32 0.0, %v680
        %v682 = vpop.f32.mrb[0].mxu0
        %v683 = vpop.f32.mrb[0].mxu0
        %v684 = vadd.f32 0.0, %v683
        %v685 = vpop.f32.mrb[0].mxu0
        %686 = vmatprep.mubr.bf16.mxu0 %v411
        %687 = vmatmul.mubr.bf16.gmra.mrb[0].mxu0 %v410
        %v688 = vpop.f32.mrb[0].mxu0
        %v689 = vadd.f32 0.0, %v688
        %v690 = vpop.f32.mrb[0].mxu0
        %v691 = vpop.f32.mrb[0].mxu0
        %v692 = vadd.f32 0.0, %v691
        %v693 = vpop.f32.mrb[0].mxu0
        %694 = vmatprep.mubr.bf16.mxu0 %v413
        %695 = vmatmul.mubr.bf16.gmra.mrb[0].mxu0 %v412
        %v696 = vpop.f32.mrb[0].mxu0
        %v697 = vadd.f32 0.0, %v696
        %v698 = vpop.f32.mrb[0].mxu0
        %v699 = vpop.f32.mrb[0].mxu0
        %v700 = vadd.f32 0.0, %v699
        %v701 = vpop.f32.mrb[0].mxu0
        %702 = vdwg.mxu0
        %v703 = vpack.c.bf16 %v580, %v577
        %v704 = vpack.c.bf16 %v588, %v585
        %v705 = vpack.c.bf16 %v596, %v593
        %v706 = vpack.c.bf16 %v604, %v601
        %v707 = vpack.c.bf16 %v612, %v609
        %v708 = vpack.c.bf16 %v620, %v617
        %v709 = vpack.c.bf16 %v628, %v625
        %v710 = vpack.c.bf16 %v636, %v633
        %v711 = vpack.c.bf16 %v644, %v641
        %v712 = vpack.c.bf16 %v652, %v649
        %v713 = vpack.c.bf16 %v660, %v657
        %v714 = vpack.c.bf16 %v668, %v665
        %v715 = vpack.c.bf16 %v676, %v673
        %v716 = vpack.c.bf16 %v684, %v681
        %v717 = vpack.c.bf16 %v692, %v689
        %v718 = vpack.c.bf16 %v700, %v697
        %v719 = vld [vmem:[#allocation7] sm:$0xff]
        %v720 = vld [vmem:[#allocation7 + $0x8] sm:$0xff]
        %v721 = vld [vmem:[#allocation7 + $0x10] sm:$0xff]
        %v722 = vld [vmem:[#allocation7 + $0x18] sm:$0xff]
        %v723 = vld [vmem:[#allocation7 + $0x20] sm:$0xff]
        %v724 = vld [vmem:[#allocation7 + $0x28] sm:$0xff]
        %v725 = vld [vmem:[#allocation7 + $0x30] sm:$0xff]
        %v726 = vld [vmem:[#allocation7 + $0x38] sm:$0xff]
        %v727 = vld [vmem:[#allocation7 + $0x40] sm:$0xff]
        %v728 = vld [vmem:[#allocation7 + $0x48] sm:$0xff]
        %v729 = vld [vmem:[#allocation7 + $0x50] sm:$0xff]
        %v730 = vld [vmem:[#allocation7 + $0x58] sm:$0xff]
        %v731 = vld [vmem:[#allocation7 + $0x60] sm:$0xff]
        %v732 = vld [vmem:[#allocation7 + $0x68] sm:$0xff]
        %v733 = vld [vmem:[#allocation7 + $0x70] sm:$0xff]
        %v734 = vld [vmem:[#allocation7 + $0x78] sm:$0xff]
        %v751 = vunpack.c.l.b16 %v719
        %v752 = vunpack.c.h.b16 %v719
        %v753 = vunpack.c.l.b16 %v720
        %v754 = vunpack.c.h.b16 %v720
        %v755 = vunpack.c.l.b16 %v721
        %v756 = vunpack.c.h.b16 %v721
        %v757 = vunpack.c.l.b16 %v722
        %v758 = vunpack.c.h.b16 %v722
        %v759 = vunpack.c.l.b16 %v723
        %v760 = vunpack.c.h.b16 %v723
        %v761 = vunpack.c.l.b16 %v724
        %v762 = vunpack.c.h.b16 %v724
        %v763 = vunpack.c.l.b16 %v725
        %v764 = vunpack.c.h.b16 %v725
        %v765 = vunpack.c.l.b16 %v726
        %v766 = vunpack.c.h.b16 %v726
        %v767 = vunpack.c.l.b16 %v727
        %v768 = vunpack.c.h.b16 %v727
        %v769 = vunpack.c.l.b16 %v728
        %v770 = vunpack.c.h.b16 %v728
        %v771 = vunpack.c.l.b16 %v729
        %v772 = vunpack.c.h.b16 %v729
        %v773 = vunpack.c.l.b16 %v730
        %v774 = vunpack.c.h.b16 %v730
        %v775 = vunpack.c.l.b16 %v731
        %v776 = vunpack.c.h.b16 %v731
        %v777 = vunpack.c.l.b16 %v732
        %v778 = vunpack.c.h.b16 %v732
        %v779 = vunpack.c.l.b16 %v733
        %v780 = vunpack.c.h.b16 %v733
        %v781 = vunpack.c.l.b16 %v734
        %v782 = vunpack.c.h.b16 %v734
        %v783 = vpack.c.b16 %v753, %v751
        %v784 = vpack.c.b16 %v754, %v752
        %v785 = vpack.c.b16 %v757, %v755
        %v786 = vpack.c.b16 %v758, %v756
        %v787 = vpack.c.b16 %v761, %v759
        %v788 = vpack.c.b16 %v762, %v760
        %v789 = vpack.c.b16 %v765, %v763
        %v790 = vpack.c.b16 %v766, %v764
        %v791 = vpack.c.b16 %v769, %v767
        %v792 = vpack.c.b16 %v770, %v768
        %v793 = vpack.c.b16 %v773, %v771
        %v794 = vpack.c.b16 %v774, %v772
        %v795 = vpack.c.b16 %v777, %v775
        %v796 = vpack.c.b16 %v778, %v776
        %v797 = vpack.c.b16 %v781, %v779
        %v798 = vpack.c.b16 %v782, %v780
        %815 = vmatprep.subr.bf16.mxu0 %v784
        %816 = vmatpush1.bf16.msra.mxu0 %v783
        %817 = vmatprep.subr.bf16.mxu0 %v786
        %818 = vmatpush1.bf16.msra.mxu0 %v785
        %819 = vmatprep.subr.bf16.mxu0 %v788
        %820 = vmatpush1.bf16.msra.mxu0 %v787
        %821 = vmatprep.subr.bf16.mxu0 %v790
        %822 = vmatpush1.bf16.msra.mxu0 %v789
        %823 = vmatprep.subr.bf16.mxu0 %v792
        %824 = vmatpush1.bf16.msra.mxu0 %v791
        %825 = vmatprep.subr.bf16.mxu0 %v794
        %826 = vmatpush1.bf16.msra.mxu0 %v793
        %827 = vmatprep.subr.bf16.mxu0 %v796
        %828 = vmatpush1.bf16.msra.mxu0 %v795
        %829 = vmatprep.subr.bf16.mxu0 %v798
        %830 = vmatpush1.bf16.msra.mxu0 %v797
        %831 = vmatprep.subr.bf16.mxu0 0
        %832 = vmatpush1.bf16.msra.mxu0 0
        %833 = vmatprep.subr.bf16.mxu0 0
        %834 = vmatpush1.bf16.msra.mxu0 0
        %835 = vmatprep.subr.bf16.mxu0 0
        %836 = vmatpush1.bf16.msra.mxu0 0
        %837 = vmatprep.subr.bf16.mxu0 0
        %838 = vmatpush1.bf16.msra.mxu0 0
        %839 = vmatprep.subr.bf16.mxu0 0
        %840 = vmatpush1.bf16.msra.mxu0 0
        %841 = vmatprep.subr.bf16.mxu0 0
        %842 = vmatpush1.bf16.msra.mxu0 0
        %843 = vmatprep.subr.bf16.mxu0 0
        %844 = vmatpush1.bf16.msra.mxu0 0
        %845 = vmatprep.subr.bf16.mxu0 0
        %846 = vmatpush1.bf16.msra.mxu0 0
        %847 = vmatprep.mubr.bf16.mxu0 0
        %848 = vmatmul.mubr.bf16.gmra.mrb[0].mxu0 %v703
        %v849 = vpop.f32.mrb[0].mxu0
        %v850 = vadd.f32 0.0, %v849
        %v851 = vpop.f32.mrb[0].mxu0
        %v852 = vadd.f32 0.0, %v851
        %v853 = vpop.f32.mrb[0].mxu0
        %v854 = vadd.f32 0.0, %v853
        %v855 = vpop.f32.mrb[0].mxu0
        %v856 = vadd.f32 0.0, %v855
        %857 = vmatprep.mubr.bf16.mxu0 0
        %858 = vmatmul.mubr.bf16.gmra.mrb[0].mxu0 %v704
        %v859 = vpop.f32.mrb[0].mxu0
        %v860 = vadd.f32 0.0, %v859
        %v861 = vpop.f32.mrb[0].mxu0
        %v862 = vadd.f32 0.0, %v861
        %v863 = vpop.f32.mrb[0].mxu0
        %v864 = vadd.f32 0.0, %v863
        %v865 = vpop.f32.mrb[0].mxu0
        %v866 = vadd.f32 0.0, %v865
        %867 = vmatprep.mubr.bf16.mxu0 0
        %868 = vmatmul.mubr.bf16.gmra.mrb[0].mxu0 %v705
        %v869 = vpop.f32.mrb[0].mxu0
        %v870 = vadd.f32 0.0, %v869
        %v871 = vpop.f32.mrb[0].mxu0
        %v872 = vadd.f32 0.0, %v871
        %v873 = vpop.f32.mrb[0].mxu0
        %v874 = vadd.f32 0.0, %v873
        %v875 = vpop.f32.mrb[0].mxu0
        %v876 = vadd.f32 0.0, %v875
        %877 = vmatprep.mubr.bf16.mxu0 0
        %878 = vmatmul.mubr.bf16.gmra.mrb[0].mxu0 %v706
        %v879 = vpop.f32.mrb[0].mxu0
        %v880 = vadd.f32 0.0, %v879
        %v881 = vpop.f32.mrb[0].mxu0
        %v882 = vadd.f32 0.0, %v881
        %v883 = vpop.f32.mrb[0].mxu0
        %v884 = vadd.f32 0.0, %v883
        %v885 = vpop.f32.mrb[0].mxu0
        %v886 = vadd.f32 0.0, %v885
        %887 = vmatprep.mubr.bf16.mxu0 0
        %888 = vmatmul.mubr.bf16.gmra.mrb[0].mxu0 %v707
        %v889 = vpop.f32.mrb[0].mxu0
        %v890 = vadd.f32 0.0, %v889
        %v891 = vpop.f32.mrb[0].mxu0
        %v892 = vadd.f32 0.0, %v891
        %v893 = vpop.f32.mrb[0].mxu0
        %v894 = vadd.f32 0.0, %v893
        %v895 = vpop.f32.mrb[0].mxu0
        %v896 = vadd.f32 0.0, %v895
        %897 = vmatprep.mubr.bf16.mxu0 0
        %898 = vmatmul.mubr.bf16.gmra.mrb[0].mxu0 %v708
        %v899 = vpop.f32.mrb[0].mxu0
        %v900 = vadd.f32 0.0, %v899
        %v901 = vpop.f32.mrb[0].mxu0
        %v902 = vadd.f32 0.0, %v901
        %v903 = vpop.f32.mrb[0].mxu0
        %v904 = vadd.f32 0.0, %v903
        %v905 = vpop.f32.mrb[0].mxu0
        %v906 = vadd.f32 0.0, %v905
        %907 = vmatprep.mubr.bf16.mxu0 0
        %908 = vmatmul.mubr.bf16.gmra.mrb[0].mxu0 %v709
        %v909 = vpop.f32.mrb[0].mxu0
        %v910 = vadd.f32 0.0, %v909
        %v911 = vpop.f32.mrb[0].mxu0
        %v912 = vadd.f32 0.0, %v911
        %v913 = vpop.f32.mrb[0].mxu0
        %v914 = vadd.f32 0.0, %v913
        %v915 = vpop.f32.mrb[0].mxu0
        %v916 = vadd.f32 0.0, %v915
        %917 = vmatprep.mubr.bf16.mxu0 0
        %918 = vmatmul.mubr.bf16.gmra.mrb[0].mxu0 %v710
        %v919 = vpop.f32.mrb[0].mxu0
        %v920 = vadd.f32 0.0, %v919
        %v921 = vpop.f32.mrb[0].mxu0
        %v922 = vadd.f32 0.0, %v921
        %v923 = vpop.f32.mrb[0].mxu0
        %v924 = vadd.f32 0.0, %v923
        %v925 = vpop.f32.mrb[0].mxu0
        %v926 = vadd.f32 0.0, %v925
        %927 = vmatprep.mubr.bf16.mxu0 0
        %928 = vmatmul.mubr.bf16.gmra.mrb[0].mxu0 %v711
        %v929 = vpop.f32.mrb[0].mxu0
        %v930 = vadd.f32 0.0, %v929
        %v931 = vpop.f32.mrb[0].mxu0
        %v932 = vadd.f32 0.0, %v931
        %v933 = vpop.f32.mrb[0].mxu0
        %v934 = vadd.f32 0.0, %v933
        %v935 = vpop.f32.mrb[0].mxu0
        %v936 = vadd.f32 0.0, %v935
        %937 = vmatprep.mubr.bf16.mxu0 0
        %938 = vmatmul.mubr.bf16.gmra.mrb[0].mxu0 %v712
        %v939 = vpop.f32.mrb[0].mxu0
        %v940 = vadd.f32 0.0, %v939
        %v941 = vpop.f32.mrb[0].mxu0
        %v942 = vadd.f32 0.0, %v941
        %v943 = vpop.f32.mrb[0].mxu0
        %v944 = vadd.f32 0.0, %v943
        %v945 = vpop.f32.mrb[0].mxu0
        %v946 = vadd.f32 0.0, %v945
        %947 = vmatprep.mubr.bf16.mxu0 0
        %948 = vmatmul.mubr.bf16.gmra.mrb[0].mxu0 %v713
        %v949 = vpop.f32.mrb[0].mxu0
        %v950 = vadd.f32 0.0, %v949
        %v951 = vpop.f32.mrb[0].mxu0
        %v952 = vadd.f32 0.0, %v951
        %v953 = vpop.f32.mrb[0].mxu0
        %v954 = vadd.f32 0.0, %v953
        %v955 = vpop.f32.mrb[0].mxu0
        %v956 = vadd.f32 0.0, %v955
        %957 = vmatprep.mubr.bf16.mxu0 0
        %958 = vmatmul.mubr.bf16.gmra.mrb[0].mxu0 %v714
        %v959 = vpop.f32.mrb[0].mxu0
        %v960 = vadd.f32 0.0, %v959
        %v961 = vpop.f32.mrb[0].mxu0
        %v962 = vadd.f32 0.0, %v961
        %v963 = vpop.f32.mrb[0].mxu0
        %v964 = vadd.f32 0.0, %v963
        %v965 = vpop.f32.mrb[0].mxu0
        %v966 = vadd.f32 0.0, %v965
        %967 = vmatprep.mubr.bf16.mxu0 0
        %968 = vmatmul.mubr.bf16.gmra.mrb[0].mxu0 %v715
        %v969 = vpop.f32.mrb[0].mxu0
        %v970 = vadd.f32 0.0, %v969
        %v971 = vpop.f32.mrb[0].mxu0
        %v972 = vadd.f32 0.0, %v971
        %v973 = vpop.f32.mrb[0].mxu0
        %v974 = vadd.f32 0.0, %v973
        %v975 = vpop.f32.mrb[0].mxu0
        %v976 = vadd.f32 0.0, %v975
        %977 = vmatprep.mubr.bf16.mxu0 0
        %978 = vmatmul.mubr.bf16.gmra.mrb[0].mxu0 %v716
        %v979 = vpop.f32.mrb[0].mxu0
        %v980 = vadd.f32 0.0, %v979
        %v981 = vpop.f32.mrb[0].mxu0
        %v982 = vadd.f32 0.0, %v981
        %v983 = vpop.f32.mrb[0].mxu0
        %v984 = vadd.f32 0.0, %v983
        %v985 = vpop.f32.mrb[0].mxu0
        %v986 = vadd.f32 0.0, %v985
        %987 = vmatprep.mubr.bf16.mxu0 0
        %988 = vmatmul.mubr.bf16.gmra.mrb[0].mxu0 %v717
        %v989 = vpop.f32.mrb[0].mxu0
        %v990 = vadd.f32 0.0, %v989
        %v991 = vpop.f32.mrb[0].mxu0
        %v992 = vadd.f32 0.0, %v991
        %v993 = vpop.f32.mrb[0].mxu0
        %v994 = vadd.f32 0.0, %v993
        %v995 = vpop.f32.mrb[0].mxu0
        %v996 = vadd.f32 0.0, %v995
        %997 = vmatprep.mubr.bf16.mxu0 0
        %998 = vmatmul.mubr.bf16.gmra.mrb[0].mxu0 %v718
        %v999 = vpop.f32.mrb[0].mxu0
        %v1000 = vadd.f32 0.0, %v999
        %v1001 = vpop.f32.mrb[0].mxu0
        %v1002 = vadd.f32 0.0, %v1001
        %v1003 = vpop.f32.mrb[0].mxu0
        %v1004 = vadd.f32 0.0, %v1003
        %v1005 = vpop.f32.mrb[0].mxu0
        %v1006 = vadd.f32 0.0, %v1005
        %1007 = vdwg.mxu0
        %1008 = vst [vmem:[%s218] sm:$0xff] %v850
        %1009 = vst [vmem:[%s218 + $0x8] sm:$0xff] %v852
        %1010 = vst [vmem:[%s218 + $0x10] sm:$0xff] %v854
        %1011 = vst [vmem:[%s218 + $0x18] sm:$0xff] %v856
        %1012 = vst [vmem:[%s218 + $0x20] sm:$0xff] %v860
        %1013 = vst [vmem:[%s218 + $0x28] sm:$0xff] %v862
        %1014 = vst [vmem:[%s218 + $0x30] sm:$0xff] %v864
        %1015 = vst [vmem:[%s218 + $0x38] sm:$0xff] %v866
        %1016 = vst [vmem:[%s218 + $0x40] sm:$0xff] %v870
        %1017 = vst [vmem:[%s218 + $0x48] sm:$0xff] %v872
        %1018 = vst [vmem:[%s218 + $0x50] sm:$0xff] %v874
        %1019 = vst [vmem:[%s218 + $0x58] sm:$0xff] %v876
        %1020 = vst [vmem:[%s218 + $0x60] sm:$0xff] %v880
        %1021 = vst [vmem:[%s218 + $0x68] sm:$0xff] %v882
        %1022 = vst [vmem:[%s218 + $0x70] sm:$0xff] %v884
        %1023 = vst [vmem:[%s218 + $0x78] sm:$0xff] %v886
        %1024 = vst [vmem:[%s218 + $0x80] sm:$0xff] %v890
        %1025 = vst [vmem:[%s218 + $0x88] sm:$0xff] %v892
        %1026 = vst [vmem:[%s218 + $0x90] sm:$0xff] %v894
        %1027 = vst [vmem:[%s218 + $0x98] sm:$0xff] %v896
        %1028 = vst [vmem:[%s218 + $0xa0] sm:$0xff] %v900
        %1029 = vst [vmem:[%s218 + $0xa8] sm:$0xff] %v902
        %1030 = vst [vmem:[%s218 + $0xb0] sm:$0xff] %v904
        %1031 = vst [vmem:[%s218 + $0xb8] sm:$0xff] %v906
        %1032 = vst [vmem:[%s218 + $0xc0] sm:$0xff] %v910
        %1033 = vst [vmem:[%s218 + $0xc8] sm:$0xff] %v912
        %1034 = vst [vmem:[%s218 + $0xd0] sm:$0xff] %v914
        %1035 = vst [vmem:[%s218 + $0xd8] sm:$0xff] %v916
        %1036 = vst [vmem:[%s218 + $0xe0] sm:$0xff] %v920
        %1037 = vst [vmem:[%s218 + $0xe8] sm:$0xff] %v922
        %1038 = vst [vmem:[%s218 + $0xf0] sm:$0xff] %v924
        %1039 = vst [vmem:[%s218 + $0xf8] sm:$0xff] %v926
        %1040 = vst [vmem:[%s218 + $0x100] sm:$0xff] %v930
        %1041 = vst [vmem:[%s218 + $0x108] sm:$0xff] %v932
        %1042 = vst [vmem:[%s218 + $0x110] sm:$0xff] %v934
        %1043 = vst [vmem:[%s218 + $0x118] sm:$0xff] %v936
        %1044 = vst [vmem:[%s218 + $0x120] sm:$0xff] %v940
        %1045 = vst [vmem:[%s218 + $0x128] sm:$0xff] %v942
        %1046 = vst [vmem:[%s218 + $0x130] sm:$0xff] %v944
        %1047 = vst [vmem:[%s218 + $0x138] sm:$0xff] %v946
        %1048 = vst [vmem:[%s218 + $0x140] sm:$0xff] %v950
        %1049 = vst [vmem:[%s218 + $0x148] sm:$0xff] %v952
        %1050 = vst [vmem:[%s218 + $0x150] sm:$0xff] %v954
        %1051 = vst [vmem:[%s218 + $0x158] sm:$0xff] %v956
        %1052 = vst [vmem:[%s218 + $0x160] sm:$0xff] %v960
        %1053 = vst [vmem:[%s218 + $0x168] sm:$0xff] %v962
        %1054 = vst [vmem:[%s218 + $0x170] sm:$0xff] %v964
        %1055 = vst [vmem:[%s218 + $0x178] sm:$0xff] %v966
        %1056 = vst [vmem:[%s218 + $0x180] sm:$0xff] %v970
        %1057 = vst [vmem:[%s218 + $0x188] sm:$0xff] %v972
        %1058 = vst [vmem:[%s218 + $0x190] sm:$0xff] %v974
        %1059 = vst [vmem:[%s218 + $0x198] sm:$0xff] %v976
        %1060 = vst [vmem:[%s218 + $0x1a0] sm:$0xff] %v980
        %1061 = vst [vmem:[%s218 + $0x1a8] sm:$0xff] %v982
        %1062 = vst [vmem:[%s218 + $0x1b0] sm:$0xff] %v984
        %1063 = vst [vmem:[%s218 + $0x1b8] sm:$0xff] %v986
        %1064 = vst [vmem:[%s218 + $0x1c0] sm:$0xff] %v990
        %1065 = vst [vmem:[%s218 + $0x1c8] sm:$0xff] %v992
        %1066 = vst [vmem:[%s218 + $0x1d0] sm:$0xff] %v994
        %1067 = vst [vmem:[%s218 + $0x1d8] sm:$0xff] %v996
        %1068 = vst [vmem:[%s218 + $0x1e0] sm:$0xff] %v1000
        %1069 = vst [vmem:[%s218 + $0x1e8] sm:$0xff] %v1002
        %1070 = vst [vmem:[%s218 + $0x1f0] sm:$0xff] %v1004
        %1071 = vst [vmem:[%s218 + $0x1f8] sm:$0xff] %v1006
        %s1072 = sand.u32 %s97, 1
        %s1073 = scalar_lea.sflag [#allocation4], %s1072
        %s1074 = sand.u32 %s97, 1
        %s1075 = smul.addr %s1074, 512
        %s1076 = scalar_lea.vmem [#allocation8], %s1075
        // Predicated region
        $region45: #{tpu_custom_call.1} parent=31 // pred_check
          %p1077 = pneg %p107
        $region46: #{tpu_custom_call.1} parent=31 // pred_check_branch
          %1079 = sbr.rel (%p1077) target = $region48
        $region47: #{tpu_custom_call.1} parent=31 // pred_region
          %s1080 = smul.u32 32, %s21
          %s1082 = ssub.s32 8192, 8192
          %1083 = vsyncadd %s1073, %s1082
          %s1084 = smul.addr %s1080, 2
          %s1085 = smul.addr %s1084, 128
          %s1086 = scalar_lea.hbm %s3, %s1085
          %s1087 = sshll.u32 %s1076, 4
          %s1088 = int_to_ptr.vmem [resolvable:$true] %s1087
          %1093 = dma.vmem_to_hbm [thread:$0]  %s1088, 8192, %s1086, %s1073, 256, 256, 16
        $region48: #{tpu_custom_call.1} parent=31 // pred_fallthru
          _
      $region32: #{tpu_custom_call.1} parent=5 // pred_fallthru
        _
      %p1094 = scmp.le.s32.totalorder 2, %s16
      // Predicated region
      $region49: #{tpu_custom_call.1} parent=5 // pred_check
        %p1095 = pneg %p1094
      $region50: #{tpu_custom_call.1} parent=5 // pred_check_branch
        %1097 = sbr.rel (%p1095) target = $region52
      $region51: #{tpu_custom_call.1} parent=5 // pred_region
        %s1098 = ssub.s32 %s16, 2
        // Predicated region
        $region53: #{tpu_custom_call.1} parent=51 // pred_check
          %p1099 = pneg %p113
        $region54: #{tpu_custom_call.1} parent=51 // pred_check_branch
          %1101 = sbr.rel (%p1099) target = $region56
        $region55: #{tpu_custom_call.1} parent=51 // pred_region
          %s1102 = sand.u32 %s98, 1
          %s1103 = scalar_lea.sflag [#allocation4], %s1102
          %s1104 = sand.u32 %s98, 1
          %s1105 = smul.addr %s1104, 512
          %s1106 = scalar_lea.vmem [#allocation8], %s1105
          %1107 = dma.done %s1103, 8192
        $region56: #{tpu_custom_call.1} parent=51 // pred_fallthru
          _
      $region52: #{tpu_custom_call.1} parent=5 // pred_fallthru
        _
    $region6: #{tpu_custom_call.1} parent=1 // loop_footer
      %s20 = sadd.s32 1, %s16
    $region7: #{tpu_custom_call.1} parent=1 // loop_footer_branch
      %15 = sbr.rel target = $region3
    $region8: #{tpu_custom_call.1} parent=1 // loop_exit
      _
    %1108 = vsyncpa [#allocation3], 1
    %s1109 = scalar_lea.sflag [#allocation3], 1
    %1110 = vsyncpa %s1109, 1
    %1111 = vsyncpa [#allocation6], 1
    %1112 = vsyncpa [#allocation4], 1
    %s1113 = scalar_lea.sflag [#allocation4], 1
    %1114 = vsyncpa %s1113, 1

</llo_original>
